<compile_context>
chip_gen: v5e
topology: v5e:2x2
jax: 0.10.0
libtpu: 0.0.40
codegen_flags: <defaults>
</compile_context>

<pallas_src>
import jax
import jax.numpy as jnp
from jax.experimental import pallas as pl
from jax.experimental.pallas import tpu as pltpu


def timesiren_kernel(x_ref, w1_ref, w2_ref, b2_ref, o_ref):
    x = x_ref[...].astype(jnp.float32)      # (tb, Kin)
    w1 = w1_ref[...].astype(jnp.float32)    # (Kin, Kout)
    w2 = w2_ref[...]                        # (Kout, Kout)
    b2 = b2_ref[...]                        # (1, Kout)

    kin = x.shape[1]
    if kin <= 8:
        # K is tiny and no lane-packing was applied: unrolled broadcast-FMA on
        # the VPU instead of burning an MXU pass on a K<=8 contraction.
        h = x[:, 0:1] * w1[0:1, :]
        for k in range(1, kin):
            h = h + x[:, k:k + 1] * w1[k:k + 1, :]
    else:
        h = jnp.dot(x, w1, preferred_element_type=jnp.float32)

    h = jnp.sin(h)                                                 # SIREN act.
    out = jnp.dot(h, w2, preferred_element_type=jnp.float32) + b2  # lin2+bias
    o_ref[...] = out.astype(o_ref.dtype)


def timesiren_forward(x, lin1_w, lin2_w, lin2_b, *, block_rows=2048):
    """TimeSiren forward.

    x:      (B, input_dim)
    lin1_w: (emb_dim, input_dim)   -- PyTorch layout (out, in), no bias
    lin2_w: (emb_dim, emb_dim)     -- PyTorch layout (out, in)
    lin2_b: (emb_dim,)
    returns (B, emb_dim)
    """
    B, input_dim = x.shape
    emb_dim = lin1_w.shape[0]

    # Pre-transpose to (in, out) so the kernel does plain x @ W.
    w1_t = lin1_w.T.astype(jnp.float32)          # (input_dim, emb_dim)
    w2_t = lin2_w.T.astype(jnp.float32)          # (emb_dim, emb_dim)
    b2 = lin2_b.reshape(1, emb_dim).astype(jnp.float32)

    # ---- lane packing: G batch rows per lane-row when emb_dim < 128 ----
    G = 1
    if emb_dim < 128 and 128 % emb_dim == 0 and B % (128 // emb_dim) == 0:
        G = 128 // emb_dim
    # TODO(synk): if B % G != 0 we fall back to the unpacked (lane-sparse)
    # path rather than padding the batch.

    if G > 1:
        kin, kout = G * input_dim, G * emb_dim          # kout == 128
        eye = jnp.eye(G, dtype=jnp.float32)
        w1_p = jnp.kron(eye, w1_t)                      # (G*in, 128) block-diag
        w2_p = jnp.kron(eye, w2_t)                      # (128, 128) block-diag
        b2_p = jnp.tile(b2, (1, G))                     # (1, 128)
        x_p = x.reshape(B // G, kin)                    # no-copy row-major view
        rows = B // G
    else:
        kin, kout = input_dim, emb_dim
        w1_p, w2_p, b2_p = w1_t, w2_t, b2
        x_p = x
        rows = B

    # ---- batch tile (in packed rows): multiple of 8, big enough to hide the
    # ~0.35us/step overhead, but leave >= 4 grid steps for v7x's 2 cores. ----
    if rows <= 8:
        tb = rows
    else:
        tb = min(block_rows, rows)
        tb = max(8, (tb // 8) * 8)
        if rows >= 32:
            tb = min(tb, max(8, ((rows // 4) // 8) * 8))
    n_blocks = pl.cdiv(rows, tb)   # ragged edge handled by Pallas (no pad/slice)

    # ---- honest VMEM budget: weights + double-buffered streamed tiles ----
    itemsize = jnp.dtype(x.dtype).itemsize
    weight_bytes = 4 * (kin * kout + kout * kout + kout)
    tile_bytes = itemsize * tb * (kin + kout)
    vmem_bytes = int(min(32 * 1024 * 1024,
                         max(2 * 1024 * 1024,
                             2 * weight_bytes + 2 * tile_bytes + (1 << 20))))

    cost = pl.CostEstimate(
        flops=2 * B * input_dim * emb_dim + 2 * B * emb_dim * emb_dim + B * emb_dim,
        transcendentals=B * emb_dim,
        bytes_accessed=itemsize * B * (input_dim + emb_dim) + weight_bytes,
    )

    out = pl.pallas_call(
        timesiren_kernel,
        out_shape=jax.ShapeDtypeStruct((rows, kout), x.dtype),
        grid_spec=pltpu.PrefetchScalarGridSpec(
            num_scalar_prefetch=0,
            grid=(n_blocks,),
            in_specs=[
                pl.BlockSpec((tb, kin), lambda i: (i, 0)),        # streamed
                pl.BlockSpec((kin, kout), lambda i: (0, 0)),      # resident
                pl.BlockSpec((kout, kout), lambda i: (0, 0)),     # resident
                pl.BlockSpec((1, kout), lambda i: (0, 0)),        # resident
            ],
            out_specs=pl.BlockSpec((tb, kout), lambda i: (i, 0)),
        ),
        compiler_params=pltpu.CompilerParams(
            dimension_semantics=("parallel",),
            vmem_limit_bytes=vmem_bytes,
        ),
        cost_estimate=cost,
    )(x_p, w1_p, w2_p, b2_p)

    if G > 1:
        out = out.reshape(B, emb_dim)   # no-copy row-major view back
    return out


if __name__ == "__main__":
    # Small shapes consistent with the module: x is (batch, input_dim).
    # batch chosen so the packed grid has multiple steps (pipelining exercised).
    batch, input_dim, emb_dim = 256, 4, 32

    key = jax.random.PRNGKey(0)
    kx, k1, k2, kb = jax.random.split(key, 4)

    x = jax.random.normal(kx, (batch, input_dim), dtype=jnp.float32)

    # "PyTorch-shaped" parameters: lin1.weight (emb, in), lin2.weight (emb, emb),
    # lin2.bias (emb,).
    lin1_w = jax.random.normal(k1, (emb_dim, input_dim), dtype=jnp.float32) * 0.1
    lin2_w = jax.random.normal(k2, (emb_dim, emb_dim), dtype=jnp.float32) * 0.1
    lin2_b = jax.random.normal(kb, (emb_dim,), dtype=jnp.float32) * 0.1

    out = timesiren_forward(x, lin1_w, lin2_w, lin2_b)
    out = jax.block_until_ready(out)

    # Pure-JAX reference check (same semantics as the PyTorch forward).
    ref = jnp.sin(x @ lin1_w.T) @ lin2_w.T + lin2_b
    assert out.shape == (batch, emb_dim)
    assert jnp.allclose(out, ref, atol=1e-5, rtol=1e-5)

    print("KERNEL_OK")
</pallas_src>

<mosaic_0001>
module attributes {stable_mosaic.version = 11 : i64} {
  func.func @timesiren_kernel(%arg0: i32, %arg1: memref<16x16xf32, #tpu.memory_space<vmem>>, %arg2: memref<16x128xf32, #tpu.memory_space<vmem>>, %arg3: memref<128x128xf32, #tpu.memory_space<vmem>>, %arg4: memref<1x128xf32, #tpu.memory_space<vmem>>, %arg5: memref<16x128xf32, #tpu.memory_space<vmem>>) attributes {dimension_semantics = [#tpu.dimension_semantics<parallel>], iteration_bounds = array<i64: 4>, scalar_prefetch = 0 : i64, scratch_operands = 0 : i64, tpu.core_type = #tpu.core_type<tc>, window_params = [{transform_indices = @transform_0, window_bounds = array<i64: 16, 16>}, {pipeline_mode = #tpu.pipeline_mode<synchronous>, transform_indices = @transform_1, window_bounds = array<i64: 16, 128>}, {pipeline_mode = #tpu.pipeline_mode<synchronous>, transform_indices = @transform_2, window_bounds = array<i64: 128, 128>}, {pipeline_mode = #tpu.pipeline_mode<synchronous>, transform_indices = @transform_3, window_bounds = array<i64: 1, 128>}, {transform_indices = @transform_4, window_bounds = array<i64: 16, 128>}]} {
    %c0 = arith.constant 0 : index
    %c0_0 = arith.constant 0 : index
    %0 = vector.load %arg1[%c0, %c0_0] : memref<16x16xf32, #tpu.memory_space<vmem>>, vector<16x16xf32>
    %c0_1 = arith.constant 0 : index
    %c0_2 = arith.constant 0 : index
    %1 = vector.load %arg2[%c0_1, %c0_2] : memref<16x128xf32, #tpu.memory_space<vmem>>, vector<16x128xf32>
    %c0_3 = arith.constant 0 : index
    %c0_4 = arith.constant 0 : index
    %2 = vector.load %arg3[%c0_3, %c0_4] : memref<128x128xf32, #tpu.memory_space<vmem>>, vector<128x128xf32>
    %c0_5 = arith.constant 0 : index
    %c0_6 = arith.constant 0 : index
    %3 = vector.load %arg4[%c0_5, %c0_6] : memref<1x128xf32, #tpu.memory_space<vmem>>, vector<1x128xf32>
    %cst = arith.constant dense<0.000000e+00> : vector<16x128xf32>
    %4 = tpu.matmul %0, %1, %cst {dimension_numbers = #tpu.dot_dimension_numbers<[1], [0], [0], [1], [0, 0, 1, 1], [], []>} : vector<16x16xf32>, vector<16x128xf32>, vector<16x128xf32> -> vector<16x128xf32>
    %5 = math.sin %4 : vector<16x128xf32>
    %cst_7 = arith.constant dense<0.000000e+00> : vector<16x128xf32>
    %6 = tpu.matmul %5, %2, %cst_7 {dimension_numbers = #tpu.dot_dimension_numbers<[1], [0], [0], [1], [0, 0, 1, 1], [], []>} : vector<16x128xf32>, vector<128x128xf32>, vector<16x128xf32> -> vector<16x128xf32>
    %7 = vector.broadcast %3 : vector<1x128xf32> to vector<16x128xf32>
    %8 = arith.addf %6, %7 : vector<16x128xf32>
    %c0_8 = arith.constant 0 : index
    %c0_9 = arith.constant 0 : index
    %9 = vector.load %arg5[%c0_8, %c0_9] : memref<16x128xf32, #tpu.memory_space<vmem>>, vector<16x128xf32>
    tpu.vector_store %arg5[%c0_8, %c0_9], %8 {strides = array<i32>} : memref<16x128xf32, #tpu.memory_space<vmem>>, vector<16x128xf32>,
    return
  }
  func.func @transform_0(%arg0: i32) -> (i32, i32) {
    %c0_i32 = arith.constant 0 : i32
    %c0_i32_0 = arith.constant 0 : i32
    return %arg0, %c0_i32 : i32, i32
  }
  func.func @transform_1(%arg0: i32) -> (i32, i32) {
    %c0_i32 = arith.constant 0 : i32
    %c0_i32_0 = arith.constant 0 : i32
    %c0_i32_1 = arith.constant 0 : i32
    return %c0_i32, %c0_i32_0 : i32, i32
  }
  func.func @transform_2(%arg0: i32) -> (i32, i32) {
    %c0_i32 = arith.constant 0 : i32
    %c0_i32_0 = arith.constant 0 : i32
    %c0_i32_1 = arith.constant 0 : i32
    return %c0_i32, %c0_i32_0 : i32, i32
  }
  func.func @transform_3(%arg0: i32) -> (i32, i32) {
    %c0_i32 = arith.constant 0 : i32
    %c0_i32_0 = arith.constant 0 : i32
    %c0_i32_1 = arith.constant 0 : i32
    return %c0_i32, %c0_i32_0 : i32, i32
  }
  func.func @transform_4(%arg0: i32) -> (i32, i32) {
    %c0_i32 = arith.constant 0 : i32
    %c0_i32_0 = arith.constant 0 : i32
    return %arg0, %c0_i32 : i32, i32
  }
}

</mosaic_0001>

<llo_original>
// kernel: tpu_custom_call.1
$region0: #{tpu_custom_call.1}
  #allocation0 [shape = 'u32[]', space=smem, size = 0x4, offset = 0x4, fixed_abs, tag = 'smem constant byte address 0x4 - core index']
  #allocation1 [shape = 'u32[72,128]{1,0:T(1,128)}', space=vmem, size = 0x9000, scoped, tag = 'internal scratch']
  %s0 = inlined_call_operand.vmem [shape: f32[64,16], index: 0, kind: input, shape index: {}]
  %s1 = inlined_call_operand.vmem [shape: f32[16,128], index: 1, kind: input, shape index: {}]
  %s2 = inlined_call_operand.hbm [shape: f32[128,128], index: 2, kind: input, shape index: {}]
  %s3 = inlined_call_operand.vmem [shape: f32[1,128], index: 3, kind: input, shape index: {}]
  %s4 = inlined_call_operand.hbm [shape: f32[64,128], index: 4, kind: output, shape index: {}]
  %s5 = sld [smem:[#allocation0]]
  $region53: #{tpu_custom_call.1} parent=0
    _
  %s7 = ssub.s32 1, %s5
  %s8 = scalar_select 0, %s7, %s5
  $region1: #{tpu_custom_call.1} parent=0
    #allocation2 [shape = 'u8[65536]{0}', space=vmem, size = 0x10000, scoped, tag = 'input window, operand 2, single buffered']
    #allocation3 [shape = 's32[2]{0}', space=sflag, size = 0x8, scoped, tag = 'scoped memory for tpu_custom_call.1']
    #allocation4 [shape = 's32[2]{0}', space=sflag, size = 0x8, scoped, tag = 'scoped memory for tpu_custom_call.1']
    #allocation5 [shape = 'u8[16384]{0}', space=vmem, size = 0x4000, scoped, tag = 'output window, operand 0']
    %9 = vsyncpa [#allocation3], 0
    %10 = vsyncpa [#allocation4], 0
    %s11 = scalar_lea.sflag [#allocation4], 1
    %12 = vsyncpa %s11, 0
    loop: start=0, step=1, limit=6
    $region2: #{tpu_custom_call.1} parent=1 // loop_pre_header
      _
    $region3: #{tpu_custom_call.1} parent=1 // loop_header
      %s14 = sphi 0, %s18
      %p15 = scmp.ge.s32.totalorder %s14, 6
      %s24 = sphi 0, %s26
      %s27 = sphi 0, %s24
      %s28 = sphi 0, %s27
      %s44 = sphi 0, %s28
      %s48 = sphi 0, %s48
      %s50 = sphi 0, %s48
      %s51 = sphi 0, %s50
      %s65 = sphi 0, %s51
      %s69 = sphi 0, %s69
      %s71 = sphi 0, %s69
      %s72 = sphi 0, %s71
      %s86 = sphi 0, %s72
      %s90 = sphi 0, %s90
      %s92 = sphi 0, %s90
      %s93 = sphi 0, %s92
      %s107 = sphi 0, %s93
      %s113 = sphi 0, %s115
      %s116 = sphi 0, %s113
      %s117 = sphi 0, %s116
      %s133 = sphi 0, %s117
    $region4: #{tpu_custom_call.1} parent=1 // loop_header_branch
      %17 = sbr.rel (%p15) target = $region8
    $region5: #{tpu_custom_call.1} parent=1 // loop_body
      %s19 = ssub.s32 %s14, 1
      %s20 = ssub.s32 %s14, 2
      %s21 = sadd.s32 %s14, 1
      %s22 = ssub.s32 %s14, %s21
      %p23 = scmp.eq.s32.totalorder %s22, 0
      %s25 = sadd.s32 %s24, 1
      %s26 = scalar_select %p23, %s24, %s25
      %p29 = pneg %p23
      %p30 = scmp.eq.s32.totalorder %s14, 3
      %p31 = por %p29, %p30
      %p32 = scmp.ne.s32.totalorder %s24, %s27
      %p33 = scmp.eq.s32.totalorder %s14, 0
      %p34 = por %p32, %p33
      %p35 = scmp.ne.s32.totalorder %s24, %s27
      %p36 = scmp.eq.s32.totalorder %s19, 3
      %p37 = por %p35, %p36
      %p38 = scmp.ne.s32.totalorder %s27, %s28
      %p39 = scmp.eq.s32.totalorder %s19, 0
      %p40 = por %p38, %p39
      %p41 = scmp.ne.s32.totalorder %s27, %s28
      %p42 = scmp.eq.s32.totalorder %s20, 3
      %p43 = por %p41, %p42
      %p45 = scmp.ne.s32.totalorder %s28, %s44
      %p46 = scmp.eq.s32.totalorder %s20, 0
      %p47 = por %p45, %p46
      %s49 = sadd.s32 %s48, 1
      %p52 = scmp.eq.s32.totalorder %s14, 3
      %p53 = scmp.ne.s32.totalorder %s48, %s50
      %p54 = scmp.eq.s32.totalorder %s14, 0
      %p55 = por %p53, %p54
      %p56 = scmp.ne.s32.totalorder %s48, %s50
      %p57 = scmp.eq.s32.totalorder %s19, 3
      %p58 = por %p56, %p57
      %p59 = scmp.ne.s32.totalorder %s50, %s51
      %p60 = scmp.eq.s32.totalorder %s19, 0
      %p61 = por %p59, %p60
      %p62 = scmp.ne.s32.totalorder %s50, %s51
      %p63 = scmp.eq.s32.totalorder %s20, 3
      %p64 = por %p62, %p63
      %p66 = scmp.ne.s32.totalorder %s51, %s65
      %p67 = scmp.eq.s32.totalorder %s20, 0
      %p68 = por %p66, %p67
      %s70 = sadd.s32 %s69, 1
      %p73 = scmp.eq.s32.totalorder %s14, 3
      %p74 = scmp.ne.s32.totalorder %s69, %s71
      %p75 = scmp.eq.s32.totalorder %s14, 0
      %p76 = por %p74, %p75
      %p77 = scmp.ne.s32.totalorder %s69, %s71
      %p78 = scmp.eq.s32.totalorder %s19, 3
      %p79 = por %p77, %p78
      %p80 = scmp.ne.s32.totalorder %s71, %s72
      %p81 = scmp.eq.s32.totalorder %s19, 0
      %p82 = por %p80, %p81
      %p83 = scmp.ne.s32.totalorder %s71, %s72
      %p84 = scmp.eq.s32.totalorder %s20, 3
      %p85 = por %p83, %p84
      %p87 = scmp.ne.s32.totalorder %s72, %s86
      %p88 = scmp.eq.s32.totalorder %s20, 0
      %p89 = por %p87, %p88
      %s91 = sadd.s32 %s90, 1
      %p94 = scmp.eq.s32.totalorder %s14, 3
      %p95 = scmp.ne.s32.totalorder %s90, %s92
      %p96 = scmp.eq.s32.totalorder %s14, 0
      %p97 = por %p95, %p96
      %p98 = scmp.ne.s32.totalorder %s90, %s92
      %p99 = scmp.eq.s32.totalorder %s19, 3
      %p100 = por %p98, %p99
      %p101 = scmp.ne.s32.totalorder %s92, %s93
      %p102 = scmp.eq.s32.totalorder %s19, 0
      %p103 = por %p101, %p102
      %p104 = scmp.ne.s32.totalorder %s92, %s93
      %p105 = scmp.eq.s32.totalorder %s20, 3
      %p106 = por %p104, %p105
      %p108 = scmp.ne.s32.totalorder %s93, %s107
      %p109 = scmp.eq.s32.totalorder %s20, 0
      %p110 = por %p108, %p109
      %s111 = ssub.s32 %s14, %s21
      %p112 = scmp.eq.s32.totalorder %s111, 0
      %s114 = sadd.s32 %s113, 1
      %s115 = scalar_select %p112, %s113, %s114
      %p118 = pneg %p112
      %p119 = scmp.eq.s32.totalorder %s14, 3
      %p120 = por %p118, %p119
      %p121 = scmp.ne.s32.totalorder %s113, %s116
      %p122 = scmp.eq.s32.totalorder %s14, 0
      %p123 = por %p121, %p122
      %p124 = scmp.ne.s32.totalorder %s113, %s116
      %p125 = scmp.eq.s32.totalorder %s19, 3
      %p126 = por %p124, %p125
      %p127 = scmp.ne.s32.totalorder %s116, %s117
      %p128 = scmp.eq.s32.totalorder %s19, 0
      %p129 = por %p127, %p128
      %p130 = scmp.ne.s32.totalorder %s116, %s117
      %p131 = scmp.eq.s32.totalorder %s20, 3
      %p132 = por %p130, %p131
      %p134 = scmp.ne.s32.totalorder %s117, %s133
      %p135 = scmp.eq.s32.totalorder %s20, 0
      %p136 = por %p134, %p135
      %p137 = scmp.le.s32.totalorder 1, %s14
      %p138 = scmp.lt.s32.totalorder %s14, 5
      %p139 = pnand %p137, %p138
      %p140 = pneg %p139
      // Predicated region
      $region9: #{tpu_custom_call.1} parent=5 // pred_check
        _
      $region10: #{tpu_custom_call.1} parent=5 // pred_check_branch
        %142 = sbr.rel (%p139) target = $region12
      $region11: #{tpu_custom_call.1} parent=5 // pred_region
        %s143 = ssub.s32 %s14, 1
        // Predicated region
        $region13: #{tpu_custom_call.1} parent=11 // pred_check
          %p144 = pneg %p61
        $region14: #{tpu_custom_call.1} parent=11 // pred_check_branch
          %146 = sbr.rel (%p144) target = $region16
        $region15: #{tpu_custom_call.1} parent=11 // pred_region
          _
        $region16: #{tpu_custom_call.1} parent=11 // pred_fallthru
          _
        // Predicated region
        $region17: #{tpu_custom_call.1} parent=11 // pred_check
          %p147 = pneg %p82
        $region18: #{tpu_custom_call.1} parent=11 // pred_check_branch
          %149 = sbr.rel (%p147) target = $region20
        $region19: #{tpu_custom_call.1} parent=11 // pred_region
          %151 = vsyncadd [#allocation3], 0
          %s152 = sshll.u32 %s2, 4
          %s153 = int_to_ptr.hbm [resolvable:$true] %s152
          %s154 = sshll.u32 [#allocation2], 4
          %s155 = int_to_ptr.vmem [resolvable:$true] %s154
          %160 = dma.hbm_to_vmem [thread:$0]  %s153, 2048, %s155, [#allocation3], 128, 128, 8
        $region20: #{tpu_custom_call.1} parent=11 // pred_fallthru
          _
        // Predicated region
        $region21: #{tpu_custom_call.1} parent=11 // pred_check
          %p161 = pneg %p103
        $region22: #{tpu_custom_call.1} parent=11 // pred_check_branch
          %163 = sbr.rel (%p161) target = $region24
        $region23: #{tpu_custom_call.1} parent=11 // pred_region
          _
        $region24: #{tpu_custom_call.1} parent=11 // pred_fallthru
          _
      $region12: #{tpu_custom_call.1} parent=5 // pred_fallthru
        _
      %p164 = scmp.lt.s32.totalorder %s14, 4
      // Predicated region
      $region25: #{tpu_custom_call.1} parent=5 // pred_check
        %p165 = pneg %p164
      $region26: #{tpu_custom_call.1} parent=5 // pred_check_branch
        %167 = sbr.rel (%p165) target = $region28
      $region27: #{tpu_custom_call.1} parent=5 // pred_region
        // Predicated region
        $region29: #{tpu_custom_call.1} parent=27 // pred_check
          %p168 = pneg %p34
        $region30: #{tpu_custom_call.1} parent=27 // pred_check_branch
          %170 = sbr.rel (%p168) target = $region32
        $region31: #{tpu_custom_call.1} parent=27 // pred_region
          %s171 = smul.u32 2, %s14
          %p172 = scmp.lt.s32.totalorder %s171, 7
          %s173 = scalar_select %p172, %s171, 7
          %s174 = smul.addr %s173, 8
          %s175 = scalar_lea.vmem %s0, %s174
          %s176 = smul.u32 2, %s14
        $region32: #{tpu_custom_call.1} parent=27 // pred_fallthru
          _
      $region28: #{tpu_custom_call.1} parent=5 // pred_fallthru
        _
      %p177 = scmp.le.s32.totalorder 1, %s14
      %p178 = scmp.lt.s32.totalorder %s14, 5
      %p179 = pnand %p177, %p178
      %p180 = pneg %p179
      // Predicated region
      $region33: #{tpu_custom_call.1} parent=5 // pred_check
        _
      $region34: #{tpu_custom_call.1} parent=5 // pred_check_branch
        %182 = sbr.rel (%p179) target = $region36
      $region35: #{tpu_custom_call.1} parent=5 // pred_region
        %s183 = ssub.s32 %s14, 1
        // Predicated region
        $region37: #{tpu_custom_call.1} parent=35 // pred_check
          %p184 = pneg %p82
        $region38: #{tpu_custom_call.1} parent=35 // pred_check_branch
          %186 = sbr.rel (%p184) target = $region40
        $region39: #{tpu_custom_call.1} parent=35 // pred_region
          %188 = dma.done [#allocation3], 2048
        $region40: #{tpu_custom_call.1} parent=35 // pred_fallthru
          _
        %s189 = smul.u32 2, %s19
        %p190 = scmp.lt.s32.totalorder %s189, 7
        %s191 = scalar_select %p190, %s189, 7
        %s192 = smul.addr %s191, 8
        %s193 = scalar_lea.vmem %s0, %s192
        %p194 = pneg %p40
        %p195 = pneg %p37
        %p196 = pneg %p61
        %p197 = pneg %p58
        %p198 = pneg %p82
        %p199 = pneg %p79
        %p200 = pneg %p103
        %p201 = pneg %p100
        %p202 = pneg %p129
        %p203 = pneg %p126
        %s204 = sand.u32 %s116, 1
        %s205 = scalar_lea.sflag [#allocation4], %s204
        %s206 = sand.u32 %s116, 1
        %s207 = smul.addr %s206, 16
        %s208 = scalar_lea.vmem [#allocation5], %s207
        %s209 = smul.u32 2, %s19
        %p210 = scmp.lt.s32.totalorder %s209, 7
        %s211 = scalar_select %p210, %s209, 7
        %s212 = smul.addr %s211, 8
        %s213 = scalar_lea.vmem %s0, %s212
        %s214 = smul.u32 2, %s19
        %s215 = smul.u32 2, %s19
        %v216 = vld [vmem:[%s213] sm:$0xff]
        %v217 = vld [vmem:[%s213 + $0x8] sm:$0xff]
        %v218 = vld [vmem:[%s1] sm:$0xff]
        %v219 = vld [vmem:[%s1 + $0x8] sm:$0xff]
        %v220 = vld [vmem:[#allocation2] sm:$0xff]
        %v221 = vld [vmem:[#allocation2 + $0x8] sm:$0xff]
        %v222 = vld [vmem:[#allocation2 + $0x10] sm:$0xff]
        %v223 = vld [vmem:[#allocation2 + $0x18] sm:$0xff]
        %v224 = vld [vmem:[#allocation2 + $0x20] sm:$0xff]
        %v225 = vld [vmem:[#allocation2 + $0x28] sm:$0xff]
        %v226 = vld [vmem:[#allocation2 + $0x30] sm:$0xff]
        %v227 = vld [vmem:[#allocation2 + $0x38] sm:$0xff]
        %v228 = vld [vmem:[#allocation2 + $0x40] sm:$0xff]
        %v229 = vld [vmem:[#allocation2 + $0x48] sm:$0xff]
        %v230 = vld [vmem:[#allocation2 + $0x50] sm:$0xff]
        %v231 = vld [vmem:[#allocation2 + $0x58] sm:$0xff]
        %v232 = vld [vmem:[#allocation2 + $0x60] sm:$0xff]
        %v233 = vld [vmem:[#allocation2 + $0x68] sm:$0xff]
        %v234 = vld [vmem:[#allocation2 + $0x70] sm:$0xff]
        %v235 = vld [vmem:[#allocation2 + $0x78] sm:$0xff]
        %v236 = vld [vmem:[%s3] sm:$0x1]
        %vm237 = vcmask 130048
        %v239 = vsel %vm237, %v216, 0
        %v242 = vsel %vm237, %v217, 0
        %244 = vmatpush.msra.mxu0 0.0
        %245 = vmatpush.msra.mxu0 0.0
        %246 = vmatpush.msra.mxu0 0.0
        %247 = vmatpush.msra.mxu0 0.0
        %248 = vmatpush.msra.mxu0 0.0
        %249 = vmatpush.msra.mxu0 0.0
        %250 = vmatpush.msra.mxu0 0.0
        %251 = vmatpush.msra.mxu0 0.0
        %252 = vmatpush.msra.mxu0 0.0
        %253 = vmatpush.msra.mxu0 0.0
        %254 = vmatpush.msra.mxu0 0.0
        %255 = vmatpush.msra.mxu0 0.0
        %256 = vmatpush.msra.mxu0 0.0
        %257 = vmatpush.msra.mxu0 0.0
        %258 = vmatpush.msra.mxu0 %v219
        %259 = vmatpush.msra.mxu0 %v218
        %260 = vmatmul.f32.gmra.mxu0 %v239
        %v261 = vpop.f32.mrf.mxu0
        %v262 = vadd.f32 0.0, %v261
        %263 = vmatmul.f32.gmra.mxu0 %v242
        %v264 = vpop.f32.mrf.mxu0
        %v265 = vadd.f32 0.0, %v264
        %266 = vdwg.mxu0
        %v267 = vand.u32 2147483647, %v262
        %vm268 = vcmp.le.f32.partialorder %v267, 0.7853982
        %vm269 = vcmp.lt.s32.totalorder %v262, 0
        %v270 = vand.u32 %v262, 2139095040
        %v271 = vshrl.u32 %v270, 23
        %v272 = vsub.s32 %v271, 127
        %v273 = vand.u32 2147483647, %v262
        %v274 = vand.u32 %v273, 8388607
        %v275 = vor.u32 %v274, 8388608
        %v276 = vsub.s32 0, %v275
        %v277 = vadd.s32 %v272, 1
        %vm278 = vcmp.gt.s32.totalorder %v277, 0
        %v279 = vsel %vm278, %v277, 0
        %v280 = vshrl.u32 %v279, 5
        %v281 = vand.u32 %v279, 31
        %v282 = vsub.s32 32, %v281
        %v283 = vshrl.u32 683565275, %v282
        %v284 = vshll.u32 683565275, %v281
        %v285 = vshrl.u32 2475754826, %v282
        %v286 = vor.u32 %v284, %v285
        %v287 = vshll.u32 2475754826, %v281
        %v288 = vshrl.u32 2131351028, %v282
        %v289 = vor.u32 %v287, %v288
        %v290 = vshll.u32 2131351028, %v281
        %v291 = vshrl.u32 2102212464, %v282
        %v292 = vor.u32 %v290, %v291
        %v293 = vshll.u32 2102212464, %v281
        %v294 = vshrl.u32 920167782, %v282
        %v295 = vor.u32 %v293, %v294
        %v296 = vshll.u32 920167782, %v281
        %v297 = vshrl.u32 1326507024, %v282
        %v298 = vor.u32 %v296, %v297
        %vm299 = vcmp.lt.s32.totalorder %v280, 1
        %vm300 = vcmp.lt.s32.totalorder %v280, 2
        %vm301 = vcmp.lt.s32.totalorder %v280, 3
        %vm302 = vcmp.lt.s32.totalorder %v280, 4
        %v303 = vsel %vm299, %v283, %v286
        %v304 = vsel %vm302, %v292, 2102212464
        %v305 = vsel %vm301, %v289, %v304
        %v306 = vsel %vm300, %v303, %v305
        %v307 = vsel %vm299, %v286, %v289
        %v308 = vsel %vm302, %v295, 920167782
        %v309 = vsel %vm301, %v292, %v308
        %v310 = vsel %vm300, %v307, %v309
        %v311 = vsel %vm299, %v289, %v292
        %v312 = vsel %vm302, %v298, 1326507024
        %v313 = vsel %vm301, %v295, %v312
        %v314 = vsel %vm300, %v311, %v313
        %v315 = vshll.u32 %v275, 8
        %v316 = vand.u32 %v315, 65535
        %v317 = vshrl.u32 %v315, 16
        %v318 = vand.u32 %v314, 65535
        %v319 = vshrl.u32 %v314, 16
        %v320 = vmul.u32 %v316, %v318
        %v321 = vmul.u32 %v316, %v319
        %v322 = vmul.u32 %v317, %v318
        %v323 = vmul.u32 %v317, %v319
        %v324 = vshll.u32 %v321, 16
        %v325 = vshrl.u32 %v321, 16
        %v326 = vshll.u32 %v322, 16
        %v327 = vshrl.u32 %v322, 16
        %vm328 = vc.u32 %v320, %v324
        %v329 = vsel %vm328, 1, 0
        %v330 = vadd.s32 %v320, %v324
        %v331 = vadd.s32 %v323, %v329
        %vm332 = vc.u32 %v330, %v326
        %v333 = vsel %vm332, 1, 0
        %v334 = vadd.s32 %v330, %v326
        %v335 = vadd.s32 %v331, %v333
        %v336 = vadd.s32 %v335, %v325
        %v337 = vadd.s32 %v336, %v327
        %v338 = vand.u32 %v315, 65535
        %v339 = vshrl.u32 %v315, 16
        %v340 = vand.u32 %v310, 65535
        %v341 = vshrl.u32 %v310, 16
        %v342 = vmul.u32 %v338, %v340
        %v343 = vmul.u32 %v338, %v341
        %v344 = vmul.u32 %v339, %v340
        %v345 = vmul.u32 %v339, %v341
        %v346 = vshll.u32 %v343, 16
        %v347 = vshrl.u32 %v343, 16
        %v348 = vshll.u32 %v344, 16
        %v349 = vshrl.u32 %v344, 16
        %vm350 = vc.u32 %v342, %v346
        %v351 = vsel %vm350, 1, 0
        %v352 = vadd.s32 %v342, %v346
        %v353 = vadd.s32 %v345, %v351
        %vm354 = vc.u32 %v352, %v348
        %v355 = vsel %vm354, 1, 0
        %v356 = vadd.s32 %v352, %v348
        %v357 = vadd.s32 %v353, %v355
        %v358 = vadd.s32 %v357, %v347
        %v359 = vadd.s32 %v358, %v349
        %v360 = vmul.u32 %v315, %v306
        %v361 = vadd.s32 %v337, %v356
        %vm362 = vc.u32 %v337, %v356
        %v363 = vadd.s32 %v359, 1
        %v364 = vsel %vm362, %v363, %v359
        %v365 = vadd.s32 %v360, %v364
        %v366 = vadd.s32 %v365, 536870912
        %v367 = vshrl.u32 %v366, 30
        %v368 = vshll.u32 %v367, 30
        %v369 = vsub.s32 %v365, %v368
        %vm370 = vcmp.lt.s32.totalorder %v369, 0
        %v371 = vsub.s32 0, %v369
        %v372 = vsel %vm370, %v371, %v369
        %v373 = vclz %v372
        %v374 = vsub.s32 %v373, 2
        %vm375 = vcmp.gt.s32.totalorder 0, %v374
        %v376 = vsel %vm375, 0, %v374
        %v377 = vsub.s32 32, %v376
        %v378 = vshll.u32 %v369, %v376
        %v379 = vshrl.u32 %v361, %v377
        %v380 = vor.u32 %v378, %v379
        %v381 = vsub.s32 4294967266, %v376
        %v382 = vadd.s32 %v381, 127
        %v383 = vshll.u32 %v382, 23
        %v384 = vor.u32 4788187, %v383
        %v385 = vand.u32 2147483647, %v384
        %v387 = vcvt.s32.f32 %v380
        %v388 = vmul.f32 %v387, %v385
        %v389 = vxor.u32 %v388, 2147483648
        %v390 = vsel %vm269, %v389, %v388
        %v391 = vsub.s32 4, %v367
        %v392 = vsel %vm269, %v391, %v367
        %v393 = vsel %vm268, %v262, %v390
        %v394 = vsel %vm268, 0, %v392
        %v395 = vmul.f32 %v393, %v393
        %v396 = vmul.f32 %v395, -0.001358992
        %v397 = vadd.f32 %v396, 0.041655596
        %v398 = vmul.f32 %v395, %v397
        %v399 = vadd.f32 %v398, -0.4999988
        %v400 = vmul.f32 %v395, %v399
        %v401 = vadd.f32 1.0, %v400
        %v402 = vmul.f32 %v393, %v393
        %v403 = vmul.f32 %v402, -0.00019511016
        %v404 = vadd.f32 %v403, 0.008332121
        %v405 = vmul.f32 %v402, %v404
        %v406 = vadd.f32 %v405, -0.16666654
        %v407 = vmul.f32 %v402, %v406
        %v408 = vadd.f32 %v407, 1.0
        %v409 = vmul.f32 %v408, %v393
        %vm410 = vweird.f32 %v262
        %v411 = vadd.s32 %v394, 3
        %v412 = vand.u32 %v411, 3
        %vm413 = vcmp.lt.s32.totalorder %v412, 2
        %vm414 = vcmp.eq.s32.totalorder %v412, 0
        %v415 = vxor.u32 %v409, 2147483648
        %v416 = vsel %vm414, %v401, %v415
        %vm417 = vcmp.eq.s32.totalorder %v412, 2
        %v418 = vxor.u32 %v401, 2147483648
        %v419 = vsel %vm417, %v418, %v409
        %v420 = vsel %vm413, %v416, %v419
        %v421 = vsel %vm410, nan, %v420
        %v422 = vand.u32 2147483647, %v265
        %vm423 = vcmp.le.f32.partialorder %v422, 0.7853982
        %vm424 = vcmp.lt.s32.totalorder %v265, 0
        %v425 = vand.u32 %v265, 2139095040
        %v426 = vshrl.u32 %v425, 23
        %v427 = vsub.s32 %v426, 127
        %v428 = vand.u32 2147483647, %v265
        %v429 = vand.u32 %v428, 8388607
        %v430 = vor.u32 %v429, 8388608
        %v431 = vsub.s32 0, %v430
        %v432 = vadd.s32 %v427, 1
        %vm433 = vcmp.gt.s32.totalorder %v432, 0
        %v434 = vsel %vm433, %v432, 0
        %v435 = vshrl.u32 %v434, 5
        %v436 = vand.u32 %v434, 31
        %v437 = vsub.s32 32, %v436
        %v438 = vshrl.u32 683565275, %v437
        %v439 = vshll.u32 683565275, %v436
        %v440 = vshrl.u32 2475754826, %v437
        %v441 = vor.u32 %v439, %v440
        %v442 = vshll.u32 2475754826, %v436
        %v443 = vshrl.u32 2131351028, %v437
        %v444 = vor.u32 %v442, %v443
        %v445 = vshll.u32 2131351028, %v436
        %v446 = vshrl.u32 2102212464, %v437
        %v447 = vor.u32 %v445, %v446
        %v448 = vshll.u32 2102212464, %v436
        %v449 = vshrl.u32 920167782, %v437
        %v450 = vor.u32 %v448, %v449
        %v451 = vshll.u32 920167782, %v436
        %v452 = vshrl.u32 1326507024, %v437
        %v453 = vor.u32 %v451, %v452
        %vm454 = vcmp.lt.s32.totalorder %v435, 1
        %vm455 = vcmp.lt.s32.totalorder %v435, 2
        %vm456 = vcmp.lt.s32.totalorder %v435, 3
        %vm457 = vcmp.lt.s32.totalorder %v435, 4
        %v458 = vsel %vm454, %v438, %v441
        %v459 = vsel %vm457, %v447, 2102212464
        %v460 = vsel %vm456, %v444, %v459
        %v461 = vsel %vm455, %v458, %v460
        %v462 = vsel %vm454, %v441, %v444
        %v463 = vsel %vm457, %v450, 920167782
        %v464 = vsel %vm456, %v447, %v463
        %v465 = vsel %vm455, %v462, %v464
        %v466 = vsel %vm454, %v444, %v447
        %v467 = vsel %vm457, %v453, 1326507024
        %v468 = vsel %vm456, %v450, %v467
        %v469 = vsel %vm455, %v466, %v468
        %v470 = vshll.u32 %v430, 8
        %v471 = vand.u32 %v470, 65535
        %v472 = vshrl.u32 %v470, 16
        %v473 = vand.u32 %v469, 65535
        %v474 = vshrl.u32 %v469, 16
        %v475 = vmul.u32 %v471, %v473
        %v476 = vmul.u32 %v471, %v474
        %v477 = vmul.u32 %v472, %v473
        %v478 = vmul.u32 %v472, %v474
        %v479 = vshll.u32 %v476, 16
        %v480 = vshrl.u32 %v476, 16
        %v481 = vshll.u32 %v477, 16
        %v482 = vshrl.u32 %v477, 16
        %vm483 = vc.u32 %v475, %v479
        %v484 = vsel %vm483, 1, 0
        %v485 = vadd.s32 %v475, %v479
        %v486 = vadd.s32 %v478, %v484
        %vm487 = vc.u32 %v485, %v481
        %v488 = vsel %vm487, 1, 0
        %v489 = vadd.s32 %v485, %v481
        %v490 = vadd.s32 %v486, %v488
        %v491 = vadd.s32 %v490, %v480
        %v492 = vadd.s32 %v491, %v482
        %v493 = vand.u32 %v470, 65535
        %v494 = vshrl.u32 %v470, 16
        %v495 = vand.u32 %v465, 65535
        %v496 = vshrl.u32 %v465, 16
        %v497 = vmul.u32 %v493, %v495
        %v498 = vmul.u32 %v493, %v496
        %v499 = vmul.u32 %v494, %v495
        %v500 = vmul.u32 %v494, %v496
        %v501 = vshll.u32 %v498, 16
        %v502 = vshrl.u32 %v498, 16
        %v503 = vshll.u32 %v499, 16
        %v504 = vshrl.u32 %v499, 16
        %vm505 = vc.u32 %v497, %v501
        %v506 = vsel %vm505, 1, 0
        %v507 = vadd.s32 %v497, %v501
        %v508 = vadd.s32 %v500, %v506
        %vm509 = vc.u32 %v507, %v503
        %v510 = vsel %vm509, 1, 0
        %v511 = vadd.s32 %v507, %v503
        %v512 = vadd.s32 %v508, %v510
        %v513 = vadd.s32 %v512, %v502
        %v514 = vadd.s32 %v513, %v504
        %v515 = vmul.u32 %v470, %v461
        %v516 = vadd.s32 %v492, %v511
        %vm517 = vc.u32 %v492, %v511
        %v518 = vadd.s32 %v514, 1
        %v519 = vsel %vm517, %v518, %v514
        %v520 = vadd.s32 %v515, %v519
        %v521 = vadd.s32 %v520, 536870912
        %v522 = vshrl.u32 %v521, 30
        %v523 = vshll.u32 %v522, 30
        %v524 = vsub.s32 %v520, %v523
        %vm525 = vcmp.lt.s32.totalorder %v524, 0
        %v526 = vsub.s32 0, %v524
        %v527 = vsel %vm525, %v526, %v524
        %v528 = vclz %v527
        %v529 = vsub.s32 %v528, 2
        %vm530 = vcmp.gt.s32.totalorder 0, %v529
        %v531 = vsel %vm530, 0, %v529
        %v532 = vsub.s32 32, %v531
        %v533 = vshll.u32 %v524, %v531
        %v534 = vshrl.u32 %v516, %v532
        %v535 = vor.u32 %v533, %v534
        %v536 = vsub.s32 4294967266, %v531
        %v537 = vadd.s32 %v536, 127
        %v538 = vshll.u32 %v537, 23
        %v539 = vor.u32 4788187, %v538
        %v540 = vand.u32 2147483647, %v539
        %v542 = vcvt.s32.f32 %v535
        %v543 = vmul.f32 %v542, %v540
        %v544 = vxor.u32 %v543, 2147483648
        %v545 = vsel %vm424, %v544, %v543
        %v546 = vsub.s32 4, %v522
        %v547 = vsel %vm424, %v546, %v522
        %v548 = vsel %vm423, %v265, %v545
        %v549 = vsel %vm423, 0, %v547
        %v550 = vmul.f32 %v548, %v548
        %v551 = vmul.f32 %v550, -0.001358992
        %v552 = vadd.f32 %v551, 0.041655596
        %v553 = vmul.f32 %v550, %v552
        %v554 = vadd.f32 %v553, -0.4999988
        %v555 = vmul.f32 %v550, %v554
        %v556 = vadd.f32 1.0, %v555
        %v557 = vmul.f32 %v548, %v548
        %v558 = vmul.f32 %v557, -0.00019511016
        %v559 = vadd.f32 %v558, 0.008332121
        %v560 = vmul.f32 %v557, %v559
        %v561 = vadd.f32 %v560, -0.16666654
        %v562 = vmul.f32 %v557, %v561
        %v563 = vadd.f32 %v562, 1.0
        %v564 = vmul.f32 %v563, %v548
        %vm565 = vweird.f32 %v265
        %v566 = vadd.s32 %v549, 3
        %v567 = vand.u32 %v566, 3
        %vm568 = vcmp.lt.s32.totalorder %v567, 2
        %vm569 = vcmp.eq.s32.totalorder %v567, 0
        %v570 = vxor.u32 %v564, 2147483648
        %v571 = vsel %vm569, %v556, %v570
        %vm572 = vcmp.eq.s32.totalorder %v567, 2
        %v573 = vxor.u32 %v556, 2147483648
        %v574 = vsel %vm572, %v573, %v564
        %v575 = vsel %vm568, %v571, %v574
        %v576 = vsel %vm565, nan, %v575
        %v578 = vperm.slane %v236, 0
        %580 = vmatpush.msra.mxu0 %v235
        %581 = vmatpush.msra.mxu0 %v234
        %582 = vmatpush.msra.mxu0 %v233
        %583 = vmatpush.msra.mxu0 %v232
        %584 = vmatpush.msra.mxu0 %v231
        %585 = vmatpush.msra.mxu0 %v230
        %586 = vmatpush.msra.mxu0 %v229
        %587 = vmatpush.msra.mxu0 %v228
        %588 = vmatpush.msra.mxu0 %v227
        %589 = vmatpush.msra.mxu0 %v226
        %590 = vmatpush.msra.mxu0 %v225
        %591 = vmatpush.msra.mxu0 %v224
        %592 = vmatpush.msra.mxu0 %v223
        %593 = vmatpush.msra.mxu0 %v222
        %594 = vmatpush.msra.mxu0 %v221
        %595 = vmatpush.msra.mxu0 %v220
        %596 = vmatmul.f32.gmra.mxu0 %v421
        %v597 = vpop.f32.mrf.mxu0
        %v598 = vadd.f32 %v578, %v597
        %599 = vmatmul.f32.gmra.mxu0 %v576
        %v600 = vpop.f32.mrf.mxu0
        %v601 = vadd.f32 %v578, %v600
        %602 = vdwg.mxu0
        %603 = vst [vmem:[%s208] sm:$0xff] %v598
        %604 = vst [vmem:[%s208 + $0x8] sm:$0xff] %v601
        %s605 = sand.u32 %s116, 1
        %s606 = scalar_lea.sflag [#allocation4], %s605
        %s607 = sand.u32 %s116, 1
        %s608 = smul.addr %s607, 16
        %s609 = scalar_lea.vmem [#allocation5], %s608
        // Predicated region
        $region41: #{tpu_custom_call.1} parent=35 // pred_check
          %p610 = pneg %p126
        $region42: #{tpu_custom_call.1} parent=35 // pred_check_branch
          %612 = sbr.rel (%p610) target = $region44
        $region43: #{tpu_custom_call.1} parent=35 // pred_region
          %s613 = smul.u32 2, %s19
          %615 = vsyncadd %s606, 0
          %s616 = smul.addr %s613, 8
          %s617 = scalar_lea.hbm %s4, %s616
          %s618 = sshll.u32 %s609, 4
          %s619 = int_to_ptr.vmem [resolvable:$true] %s618
          %s620 = sshll.u32 %s617, 4
          %s621 = int_to_ptr.hbm [resolvable:$true] %s620
          %626 = dma.vmem_to_hbm [thread:$0]  %s619, 256, %s621, %s606, 128, 128, 8
        $region44: #{tpu_custom_call.1} parent=35 // pred_fallthru
          _
      $region36: #{tpu_custom_call.1} parent=5 // pred_fallthru
        _
      %p627 = scmp.le.s32.totalorder 2, %s14
      // Predicated region
      $region45: #{tpu_custom_call.1} parent=5 // pred_check
        %p628 = pneg %p627
      $region46: #{tpu_custom_call.1} parent=5 // pred_check_branch
        %630 = sbr.rel (%p628) target = $region48
      $region47: #{tpu_custom_call.1} parent=5 // pred_region
        %s631 = ssub.s32 %s14, 2
        // Predicated region
        $region49: #{tpu_custom_call.1} parent=47 // pred_check
          %p632 = pneg %p132
        $region50: #{tpu_custom_call.1} parent=47 // pred_check_branch
          %634 = sbr.rel (%p632) target = $region52
        $region51: #{tpu_custom_call.1} parent=47 // pred_region
          %s635 = sand.u32 %s117, 1
          %s636 = scalar_lea.sflag [#allocation4], %s635
          %s637 = sand.u32 %s117, 1
          %s638 = smul.addr %s637, 16
          %s639 = scalar_lea.vmem [#allocation5], %s638
          %641 = dma.done %s636, 256
        $region52: #{tpu_custom_call.1} parent=47 // pred_fallthru
          _
      $region48: #{tpu_custom_call.1} parent=5 // pred_fallthru
        _
    $region6: #{tpu_custom_call.1} parent=1 // loop_footer
      %s18 = sadd.s32 1, %s14
    $region7: #{tpu_custom_call.1} parent=1 // loop_footer_branch
      %13 = sbr.rel target = $region3
    $region8: #{tpu_custom_call.1} parent=1 // loop_exit
      _
    %642 = vsyncpa [#allocation3], 1
    %s643 = scalar_lea.sflag [#allocation3], 1
    %644 = vsyncpa %s643, 1
    %645 = vsyncpa [#allocation4], 1
    %s646 = scalar_lea.sflag [#allocation4], 1
    %647 = vsyncpa %s646, 1

</llo_original>
